<compile_context>
chip_gen: v6e
topology: v6e:2x2x1
jax: 0.10.0
libtpu: 0.0.40
codegen_flags: <defaults>
</compile_context>

<pallas_src>
import functools

import jax
import jax.numpy as jnp
from jax import lax
from jax.experimental import pallas as pl
from jax.experimental.pallas import tpu as pltpu

_EPS = 1e-12        # matches torch.nn.functional.normalize default eps
_NEG_INF = -1e30    # finite mask value for padded key columns


def _round_up(x, m):
    return ((x + m - 1) // m) * m


def _normalize_f32(x):
    """x / max(||x||_2, eps) computed as x * rsqrt(max(sum(x^2), eps^2))."""
    ss = jnp.sum(x * x, axis=1, keepdims=True)
    return x * lax.rsqrt(jnp.maximum(ss, _EPS * _EPS))


def _vmem_capacity_bytes():
    try:
        return int(pltpu.get_tpu_info().vmem_capacity_bytes)
    except Exception:
        return 64 << 20           # v7x-safe fallback


def _pick_tiles(B, num_keys, Dp, itemsize, *, square):
    """Pick (row_tile, key_tile, vmem_limit_bytes) under a VMEM budget."""
    vmem_cap = _vmem_capacity_bytes()
    budget = int(0.6 * vmem_cap)  # leave headroom for compiler-internal scratch

    row_align = 128 if square else 16   # square tiles feed the diagonal extraction
    tq = min(512, _round_up(B, row_align))
    # Guarantee >= 2 row tiles (megacore sharding on dual-TC chips) once B is
    # large enough that halving the row tile still leaves a roofline-friendly tile.
    if B > 256 and _round_up(B, tq) == tq:
        tq = max(row_align, _round_up((B + 1) // 2, row_align))
    tk = tq if square else min(512, _round_up(num_keys, 128))

    def need(tq_, tk_):
        # double-buffered anchor & key blocks + small per-row/col f32 streams
        return 2 * Dp * itemsize * (tq_ + tk_) + 32 * tq_ + 16 * tk_

    while need(tq, tk) > budget and tk > 128:
        tk = max(128, (tk // 2 // 128) * 128)
        if square:
            tq = tk
    min_tq = 128 if square else 16
    while need(tq, tk) > budget and tq > min_tq:
        tq = max(min_tq, (tq // 2 // row_align) * row_align)
        if square:
            tk = tq

    vmem_limit = int(min(0.9 * vmem_cap, max(2 * need(tq, tk), 32 << 20)))
    return tq, tk, vmem_limit


# --------------------------------------------------------------------------
# Kernels
# --------------------------------------------------------------------------
def _infonce_neg_kernel(*refs, use_mask):
    """Explicit negatives: logits_i = [pos_i, a_i . n_j].  Anchors are already
    L2-normalized and scaled by 1/T; negatives are already L2-normalized."""
    if use_mask:
        a_ref, pos_ref, n_ref, mask_ref, o_ref, m_s, l_s = refs
    else:
        a_ref, pos_ref, n_ref, o_ref, m_s, l_s = refs

    k = pl.program_id(1)

    @pl.when(k == 0)
    def _init():
        m_s[...] = pos_ref[...]                  # logit 0 is the positive
        l_s[...] = jnp.ones_like(pos_ref[...])   # exp(pos - pos) == 1

    # [tq, tk] similarity tile: contract dim 1 of BOTH operands (A @ B.T) so the
    # MXU consumes the key tile directly without an XLU transpose.
    s = lax.dot_general(a_ref[...], n_ref[...],
                        dimension_numbers=(((1,), (1,)), ((), ())),
                        preferred_element_type=jnp.float32)
    if use_mask:
        s = s + mask_ref[...]                    # -1e30 on padded key columns

    m_prev = m_s[...]
    m_new = jnp.maximum(m_prev, jnp.max(s, axis=1, keepdims=True))
    l_s[...] = (l_s[...] * jnp.exp(m_prev - m_new)
                + jnp.sum(jnp.exp(s - m_new), axis=1, keepdims=True))
    m_s[...] = m_new

    @pl.when(k == pl.num_programs(1) - 1)
    def _finalize():
        o_ref[...] = m_s[...] + jnp.log(l_s[...]) - pos_ref[...]


def _infonce_inbatch_kernel(*refs, use_mask, tq):
    """In-batch negatives: logits_i = a_i . p_j (label i = diagonal)."""
    if use_mask:
        a_ref, pk_ref, mask_ref, o_ref, m_s, l_s, pos_s = refs
    else:
        a_ref, pk_ref, o_ref, m_s, l_s, pos_s = refs

    i = pl.program_id(0)
    k = pl.program_id(1)

    @pl.when(k == 0)
    def _init():
        m_s[...] = jnp.full((tq, 1), _NEG_INF, jnp.float32)
        l_s[...] = jnp.zeros((tq, 1), jnp.float32)

    s = lax.dot_general(a_ref[...], pk_ref[...],
                        dimension_numbers=(((1,), (1,)), ((), ())),
                        preferred_element_type=jnp.float32)
    if use_mask:
        s = s + mask_ref[...]

    # Diagonal block: extract the positive logit straight from the MXU output.
    @pl.when(k == i)
    def _diag():
        r = lax.broadcasted_iota(jnp.int32, s.shape, 0)
        c = lax.broadcasted_iota(jnp.int32, s.shape, 1)
        pos_s[...] = jnp.sum(jnp.where(r == c, s, 0.0), axis=1, keepdims=True)

    m_prev = m_s[...]
    m_new = jnp.maximum(m_prev, jnp.max(s, axis=1, keepdims=True))
    l_s[...] = (l_s[...] * jnp.exp(m_prev - m_new)
                + jnp.sum(jnp.exp(s - m_new), axis=1, keepdims=True))
    m_s[...] = m_new

    @pl.when(k == pl.num_programs(1) - 1)
    def _finalize():
        o_ref[...] = m_s[...] + jnp.log(l_s[...]) - pos_s[...]


# --------------------------------------------------------------------------
# Wrapper
# --------------------------------------------------------------------------
def infonce_loss(anchor, positive, negative=None, *,
                 temperature=0.07, lambda_infonce=1.0):
    """Pallas implementation of InfoNCELoss.forward. Returns a scalar f32."""
    B, D = anchor.shape
    Dp = _round_up(D, 128)                  # lane-dense contraction dim
    inv_t = float(1.0 / temperature)
    compute_dtype = anchor.dtype            # bf16 inputs keep the MXU at full rate
    itemsize = jnp.dtype(compute_dtype).itemsize

    # One-time O((B+N)*D) normalization in f32 (negligible next to the
    # O(B*N*D) similarity matmul); 1/T folded into the anchors once.
    a_n = _normalize_f32(anchor.astype(jnp.float32)) * inv_t
    p_n = _normalize_f32(positive.astype(jnp.float32))

    def _pad(x, rows, cols):
        r, c = x.shape
        if r == rows and c == cols:
            return x
        return jnp.pad(x, ((0, rows - r), (0, cols - c)))

    if negative is not None:
        keys = _normalize_f32(negative.astype(jnp.float32))
        num_keys = negative.shape[0]
        square = False
    else:
        keys = p_n
        num_keys = B
        square = True

    tq, tk, vmem_limit = _pick_tiles(B, num_keys, Dp, itemsize, square=square)
    Bp = _round_up(B, tq)
    Np = _round_up(num_keys, tk)
    use_mask = Np != num_keys               # static: only mask when padding exists

    a_pad = _pad(a_n, Bp, Dp).astype(compute_dtype)
    k_pad = _pad(keys, Np, Dp).astype(compute_dtype)

    inputs = [a_pad]
    in_specs = [pl.BlockSpec((tq, Dp), lambda i, k: (i, 0))]       # anchors (1/T folded)
    if not square:
        pos = jnp.sum(a_n * p_n, axis=1, keepdims=True)           # pos_sim / T, f32
        inputs.append(_pad(pos, Bp, 1))
        in_specs.append(pl.BlockSpec((tq, 1), lambda i, k: (i, 0)))
    inputs.append(k_pad)
    in_specs.append(pl.BlockSpec((tk, Dp), lambda i, k: (k, 0)))   # keys / negatives
    if use_mask:
        col = jnp.arange(Np, dtype=jnp.int32)
        mask_row = jnp.where(col < num_keys, 0.0, _NEG_INF).astype(jnp.float32)[None, :]
        inputs.append(mask_row)
        in_specs.append(pl.BlockSpec((1, tk), lambda i, k: (0, k)))

    scratch = [pltpu.VMEM((tq, 1), jnp.float32),    # running max
               pltpu.VMEM((tq, 1), jnp.float32)]    # running sum-exp
    if square:
        scratch.append(pltpu.VMEM((tq, 1), jnp.float32))   # positive (diagonal) logit
        kernel = functools.partial(_infonce_inbatch_kernel, use_mask=use_mask, tq=tq)
    else:
        kernel = functools.partial(_infonce_neg_kernel, use_mask=use_mask)

    # TODO(synk): if xprof shows exposed per-step DMA for small D, bump the key
    # BlockSpec to pipeline_mode=pl.Buffered(3) (VMEM budget permitting on v7x).
    per_row = pl.pallas_call(
        kernel,
        out_shape=jax.ShapeDtypeStruct((Bp, 1), jnp.float32),
        grid_spec=pltpu.PrefetchScalarGridSpec(
            num_scalar_prefetch=0,
            grid=(Bp // tq, Np // tk),
            in_specs=in_specs,
            out_specs=pl.BlockSpec((tq, 1), lambda i, k: (i, 0)),
            scratch_shapes=scratch),
        compiler_params=pltpu.CompilerParams(
            dimension_semantics=("parallel", "arbitrary"),
            vmem_limit_bytes=vmem_limit),
    )(*inputs)

    loss = jnp.sum(per_row[:B, 0]) / B          # mean over real rows only
    return (lambda_infonce * loss).astype(jnp.float32)


# --------------------------------------------------------------------------
# Plain-JAX reference mirroring the PyTorch module (for verification)
# --------------------------------------------------------------------------
def _reference(anchor, positive, negative=None, *, temperature=0.07, lam=1.0):
    an = _normalize_f32(anchor.astype(jnp.float32))
    pn = _normalize_f32(positive.astype(jnp.float32))
    if negative is not None:
        nn = _normalize_f32(negative.astype(jnp.float32))
        pos = jnp.sum(an * pn, axis=1) / temperature
        neg = (an @ nn.T) / temperature
        logits = jnp.concatenate([pos[:, None], neg], axis=1)
        loss = jnp.mean(jax.nn.logsumexp(logits, axis=1) - logits[:, 0])
    else:
        sim = (an @ pn.T) / temperature
        loss = jnp.mean(jax.nn.logsumexp(sim, axis=1) - jnp.diag(sim))
    return lam * loss


if __name__ == "__main__":
    key = jax.random.PRNGKey(0)
    k1, k2, k3 = jax.random.split(key, 3)

    batch, dim, num_neg = 8, 32, 16
    anchor = jax.random.normal(k1, (batch, dim), dtype=jnp.float32)
    positive = jax.random.normal(k2, (batch, dim), dtype=jnp.float32)
    negative = jax.random.normal(k3, (num_neg, dim), dtype=jnp.float32)

    temperature, lambda_infonce = 0.07, 1.0

    # Case 1: explicit negatives
    loss_neg = infonce_loss(anchor, positive, negative,
                            temperature=temperature,
                            lambda_infonce=lambda_infonce)
    # Case 2: in-batch negatives (negative_embeddings is None)
    loss_inb = infonce_loss(anchor, positive,
                            temperature=temperature,
                            lambda_infonce=lambda_infonce)
    jax.block_until_ready((loss_neg, loss_inb))

    ref_neg = _reference(anchor, positive, negative,
                         temperature=temperature, lam=lambda_infonce)
    ref_inb = _reference(anchor, positive,
                         temperature=temperature, lam=lambda_infonce)

    assert jnp.allclose(loss_neg, ref_neg, rtol=1e-4, atol=1e-4), (loss_neg, ref_neg)
    assert jnp.allclose(loss_inb, ref_inb, rtol=1e-4, atol=1e-4), (loss_inb, ref_inb)

    print("KERNEL_OK")
</pallas_src>

<mosaic_0001>
module attributes {stable_mosaic.version = 11 : i64} {
  func.func @_infonce_neg_kernel(%arg0: i32, %arg1: i32, %arg2: memref<16x128xf32, #tpu.memory_space<vmem>>, %arg3: memref<16x1xf32, #tpu.memory_space<vmem>>, %arg4: memref<128x128xf32, #tpu.memory_space<vmem>>, %arg5: memref<1x128xf32, #tpu.memory_space<vmem>>, %arg6: memref<16x1xf32, #tpu.memory_space<vmem>>, %arg7: memref<16x1xf32, #tpu.memory_space<vmem>>, %arg8: memref<16x1xf32, #tpu.memory_space<vmem>>) attributes {dimension_semantics = [#tpu.dimension_semantics<parallel>, #tpu.dimension_semantics<arbitrary>], iteration_bounds = array<i64: 1, 1>, scalar_prefetch = 0 : i64, scratch_operands = 2 : i64, tpu.core_type = #tpu.core_type<tc>, window_params = [{transform_indices = @transform_0, window_bounds = array<i64: 16, 128>}, {transform_indices = @transform_1, window_bounds = array<i64: 16, 1>}, {transform_indices = @transform_2, window_bounds = array<i64: 128, 128>}, {transform_indices = @transform_3, window_bounds = array<i64: 1, 128>}, {transform_indices = @transform_4, window_bounds = array<i64: 16, 1>}]} {
    %c0_i32 = arith.constant 0 : i32
    %0 = arith.cmpi eq, %arg1, %c0_i32 : i32
    %1 = arith.extui %0 : i1 to i32
    %c0_i32_0 = arith.constant 0 : i32
    %2 = arith.cmpi ne, %1, %c0_i32_0 : i32
    scf.if %2 {
      %c0_18 = arith.constant 0 : index
      %c0_19 = arith.constant 0 : index
      %28 = vector.load %arg3[%c0_18, %c0_19] : memref<16x1xf32, #tpu.memory_space<vmem>>, vector<16x1xf32>
      %c0_20 = arith.constant 0 : index
      %c0_21 = arith.constant 0 : index
      %29 = vector.load %arg7[%c0_20, %c0_21] : memref<16x1xf32, #tpu.memory_space<vmem>>, vector<16x1xf32>
      tpu.vector_store %arg7[%c0_20, %c0_21], %28 {strides = array<i32>} : memref<16x1xf32, #tpu.memory_space<vmem>>, vector<16x1xf32>,
      %cst_22 = arith.constant 1.000000e+00 : f32
      %30 = vector.broadcast %cst_22 : f32 to vector<16x1xf32>
      %c0_23 = arith.constant 0 : index
      %c0_24 = arith.constant 0 : index
      %31 = vector.load %arg8[%c0_23, %c0_24] : memref<16x1xf32, #tpu.memory_space<vmem>>, vector<16x1xf32>
      tpu.vector_store %arg8[%c0_23, %c0_24], %30 {strides = array<i32>} : memref<16x1xf32, #tpu.memory_space<vmem>>, vector<16x1xf32>,
    } else {
    }
    %c0 = arith.constant 0 : index
    %c0_1 = arith.constant 0 : index
    %3 = vector.load %arg2[%c0, %c0_1] : memref<16x128xf32, #tpu.memory_space<vmem>>, vector<16x128xf32>
    %c0_2 = arith.constant 0 : index
    %c0_3 = arith.constant 0 : index
    %4 = vector.load %arg4[%c0_2, %c0_3] : memref<128x128xf32, #tpu.memory_space<vmem>>, vector<128x128xf32>
    %cst = arith.constant dense<0.000000e+00> : vector<16x128xf32>
    %5 = tpu.matmul %3, %4, %cst {dimension_numbers = #tpu.dot_dimension_numbers<[1], [1], [0], [0], [0, 0, 1, 0], [], []>} : vector<16x128xf32>, vector<128x128xf32>, vector<16x128xf32> -> vector<16x128xf32>
    %c0_4 = arith.constant 0 : index
    %c0_5 = arith.constant 0 : index
    %6 = vector.load %arg5[%c0_4, %c0_5] : memref<1x128xf32, #tpu.memory_space<vmem>>, vector<1x128xf32>
    %7 = vector.broadcast %6 : vector<1x128xf32> to vector<16x128xf32>
    %8 = arith.addf %5, %7 : vector<16x128xf32>
    %c0_6 = arith.constant 0 : index
    %c0_7 = arith.constant 0 : index
    %9 = vector.load %arg7[%c0_6, %c0_7] : memref<16x1xf32, #tpu.memory_space<vmem>>, vector<16x1xf32>
    %cst_8 = arith.constant dense<0xFF800000> : vector<16xf32>
    %10 = vector.multi_reduction <maximumf>, %8, %cst_8 [1] : vector<16x128xf32> to vector<16xf32>
    %11 = vector.shape_cast %10 : vector<16xf32> to vector<16x1xf32>
    %12 = arith.maximumf %9, %11 : vector<16x1xf32>
    %c0_9 = arith.constant 0 : index
    %c0_10 = arith.constant 0 : index
    %13 = vector.load %arg8[%c0_9, %c0_10] : memref<16x1xf32, #tpu.memory_space<vmem>>, vector<16x1xf32>
    %14 = arith.subf %9, %12 : vector<16x1xf32>
    %15 = math.exp %14 : vector<16x1xf32>
    %16 = arith.mulf %13, %15 : vector<16x1xf32>
    %17 = vector.broadcast %12 : vector<16x1xf32> to vector<16x128xf32>
    %18 = arith.subf %8, %17 : vector<16x128xf32>
    %19 = math.exp %18 : vector<16x128xf32>
    %cst_11 = arith.constant dense<0.000000e+00> : vector<16xf32>
    %20 = vector.multi_reduction <add>, %19, %cst_11 [1] : vector<16x128xf32> to vector<16xf32>
    %21 = vector.shape_cast %20 : vector<16xf32> to vector<16x1xf32>
    %22 = arith.addf %16, %21 : vector<16x1xf32>
    %c0_12 = arith.constant 0 : index
    %c0_13 = arith.constant 0 : index
    %23 = vector.load %arg8[%c0_12, %c0_13] : memref<16x1xf32, #tpu.memory_space<vmem>>, vector<16x1xf32>
    tpu.vector_store %arg8[%c0_12, %c0_13], %22 {strides = array<i32>} : memref<16x1xf32, #tpu.memory_space<vmem>>, vector<16x1xf32>,
    %c0_14 = arith.constant 0 : index
    %c0_15 = arith.constant 0 : index
    %24 = vector.load %arg7[%c0_14, %c0_15] : memref<16x1xf32, #tpu.memory_space<vmem>>, vector<16x1xf32>
    tpu.vector_store %arg7[%c0_14, %c0_15], %12 {strides = array<i32>} : memref<16x1xf32, #tpu.memory_space<vmem>>, vector<16x1xf32>,
    %c0_i32_16 = arith.constant 0 : i32
    %25 = arith.cmpi eq, %arg1, %c0_i32_16 : i32
    %26 = arith.extui %25 : i1 to i32
    %c0_i32_17 = arith.constant 0 : i32
    %27 = arith.cmpi ne, %26, %c0_i32_17 : i32
    scf.if %27 {
      %c0_18 = arith.constant 0 : index
      %c0_19 = arith.constant 0 : index
      %28 = vector.load %arg7[%c0_18, %c0_19] : memref<16x1xf32, #tpu.memory_space<vmem>>, vector<16x1xf32>
      %c0_20 = arith.constant 0 : index
      %c0_21 = arith.constant 0 : index
      %29 = vector.load %arg8[%c0_20, %c0_21] : memref<16x1xf32, #tpu.memory_space<vmem>>, vector<16x1xf32>
      %30 = math.log %29 : vector<16x1xf32>
      %31 = arith.addf %28, %30 : vector<16x1xf32>
      %c0_22 = arith.constant 0 : index
      %c0_23 = arith.constant 0 : index
      %32 = vector.load %arg3[%c0_22, %c0_23] : memref<16x1xf32, #tpu.memory_space<vmem>>, vector<16x1xf32>
      %33 = arith.subf %31, %32 : vector<16x1xf32>
      %c0_24 = arith.constant 0 : index
      %c0_25 = arith.constant 0 : index
      %34 = vector.load %arg6[%c0_24, %c0_25] : memref<16x1xf32, #tpu.memory_space<vmem>>, vector<16x1xf32>
      tpu.vector_store %arg6[%c0_24, %c0_25], %33 {strides = array<i32>} : memref<16x1xf32, #tpu.memory_space<vmem>>, vector<16x1xf32>,
    } else {
    }
    return
  }
  func.func @transform_0(%arg0: i32, %arg1: i32) -> (i32, i32) {
    %c0_i32 = arith.constant 0 : i32
    %c0_i32_0 = arith.constant 0 : i32
    return %arg0, %c0_i32 : i32, i32
  }
  func.func @transform_1(%arg0: i32, %arg1: i32) -> (i32, i32) {
    %c0_i32 = arith.constant 0 : i32
    %c0_i32_0 = arith.constant 0 : i32
    return %arg0, %c0_i32 : i32, i32
  }
  func.func @transform_2(%arg0: i32, %arg1: i32) -> (i32, i32) {
    %c0_i32 = arith.constant 0 : i32
    %c0_i32_0 = arith.constant 0 : i32
    return %arg1, %c0_i32 : i32, i32
  }
  func.func @transform_3(%arg0: i32, %arg1: i32) -> (i32, i32) {
    %c0_i32 = arith.constant 0 : i32
    %c0_i32_0 = arith.constant 0 : i32
    return %c0_i32, %arg1 : i32, i32
  }
  func.func @transform_4(%arg0: i32, %arg1: i32) -> (i32, i32) {
    %c0_i32 = arith.constant 0 : i32
    %c0_i32_0 = arith.constant 0 : i32
    return %arg0, %c0_i32 : i32, i32
  }
}

</mosaic_0001>

<llo_original>
// kernel: tpu_custom_call.1
$region0: #{tpu_custom_call.1}
  #allocation0 [shape = 'u32[]', space=smem, size = 0x4, offset = 0x4, fixed_abs, tag = 'smem constant byte address 0x4 - core index']
  #allocation1 [shape = 'u32[144,128]{1,0:T(1,128)}', space=vmem, size = 0x12000, scoped, tag = 'internal scratch']
  #allocation2 [shape = 'f32[16,1]{1,0:T(8,128)}', space=vmem, size = 0x2000, scoped, tag = 'scratch operand']
  #allocation3 [shape = 'f32[16,1]{1,0:T(8,128)}', space=vmem, size = 0x2000, scoped, tag = 'scratch operand']
  %s0 = inlined_call_operand.vmem [shape: f32[16,128], index: 0, kind: input, shape index: {}]
  %s1 = inlined_call_operand.vmem [shape: f32[16,1], index: 1, kind: input, shape index: {}]
  %s2 = inlined_call_operand.hbm [shape: f32[128,128], index: 2, kind: input, shape index: {}]
  %s3 = inlined_call_operand.vmem [shape: f32[1,128], index: 3, kind: input, shape index: {}]
  %s4 = inlined_call_operand.vmem [shape: f32[16,1], index: 4, kind: output, shape index: {}]
  %s5 = sld [smem:[#allocation0]]
  $region38: #{tpu_custom_call.1} parent=0
    _
  %s7 = ssub.s32 1, %s5
  %s8 = scalar_select 0, %s7, %s5
  $region1: #{tpu_custom_call.1} parent=0
    #allocation4 [shape = 'u8[65536]{0}', space=vmem, size = 0x10000, scoped, tag = 'input window, operand 2, single buffered']
    #allocation5 [shape = 's32[1]{0}', space=sflag, size = 0x4, scoped, tag = 'scoped memory for tpu_custom_call.1']
    %9 = vsyncpa [#allocation5], 0
    // Predicated region
    $region2: #{tpu_custom_call.1} parent=1 // pred_check
      _
    $region3: #{tpu_custom_call.1} parent=1 // pred_check_branch
      %11 = sbr.rel (0) target = $region5
    $region4: #{tpu_custom_call.1} parent=1 // pred_region
      _
    $region5: #{tpu_custom_call.1} parent=1 // pred_fallthru
      _
    // Predicated region
    $region6: #{tpu_custom_call.1} parent=1 // pred_check
      _
    $region7: #{tpu_custom_call.1} parent=1 // pred_check_branch
      %13 = sbr.rel (0) target = $region9
    $region8: #{tpu_custom_call.1} parent=1 // pred_region
      _
    $region9: #{tpu_custom_call.1} parent=1 // pred_fallthru
      _
    // Predicated region
    $region10: #{tpu_custom_call.1} parent=1 // pred_check
      _
    $region11: #{tpu_custom_call.1} parent=1 // pred_check_branch
      %15 = sbr.rel (0) target = $region13
    $region12: #{tpu_custom_call.1} parent=1 // pred_region
      %s17 = ssub.s32 2048, 2048
      %18 = vsyncadd [#allocation5], %s17
      %s19 = sshll.u32 [#allocation4], 4
      %s20 = int_to_ptr.vmem [resolvable:$true] %s19
      %25 = dma.hbm_to_vmem [thread:$0]  %s2, 2048, %s20, [#allocation5], 128, 128, 8
    $region13: #{tpu_custom_call.1} parent=1 // pred_fallthru
      _
    // Predicated region
    $region14: #{tpu_custom_call.1} parent=1 // pred_check
      _
    $region15: #{tpu_custom_call.1} parent=1 // pred_check_branch
      %27 = sbr.rel (0) target = $region17
    $region16: #{tpu_custom_call.1} parent=1 // pred_region
      _
    $region17: #{tpu_custom_call.1} parent=1 // pred_fallthru
      _
    // Predicated region
    $region18: #{tpu_custom_call.1} parent=1 // pred_check
      _
    $region19: #{tpu_custom_call.1} parent=1 // pred_check_branch
      %29 = sbr.rel (0) target = $region21
    $region20: #{tpu_custom_call.1} parent=1 // pred_region
      %30 = dma.done [#allocation5], 2048
    $region21: #{tpu_custom_call.1} parent=1 // pred_fallthru
      _
    %p31 = scmp.eq.s32.totalorder 0, 0
    // Predicated region
    $region22: #{tpu_custom_call.1} parent=1 // pred_check
      %p32 = pneg %p31
    $region23: #{tpu_custom_call.1} parent=1 // pred_check_branch
      %34 = sbr.rel (%p32) target = $region25
    $region24: #{tpu_custom_call.1} parent=1 // pred_region
      %v35 = vld [vmem:[%s1] sm:$0xff]
      %v36 = vld [vmem:[%s1 + $0x8] sm:$0xff]
      %vm37 = vcmask 7168
      %38 = vst.msk [vmem:[#allocation2] sm:$0xff] %vm37, %v35
      %39 = vst.msk [vmem:[#allocation2 + $0x8] sm:$0xff] %vm37, %v36
      %40 = vst.msk [vmem:[#allocation3] sm:$0xff] %vm37, 1.0
      %41 = vst.msk [vmem:[#allocation3 + $0x8] sm:$0xff] %vm37, 1.0
    $region25: #{tpu_custom_call.1} parent=1 // pred_fallthru
      _
    %v42 = vld [vmem:[%s0] sm:$0xff]
    %v43 = vld [vmem:[%s0 + $0x8] sm:$0xff]
    %v44 = vld [vmem:[#allocation4] sm:$0xff]
    %v45 = vld [vmem:[#allocation4 + $0x8] sm:$0xff]
    %v46 = vld [vmem:[#allocation4 + $0x10] sm:$0xff]
    %v47 = vld [vmem:[#allocation4 + $0x18] sm:$0xff]
    %v48 = vld [vmem:[#allocation4 + $0x20] sm:$0xff]
    %v49 = vld [vmem:[#allocation4 + $0x28] sm:$0xff]
    %v50 = vld [vmem:[#allocation4 + $0x30] sm:$0xff]
    %v51 = vld [vmem:[#allocation4 + $0x38] sm:$0xff]
    %v52 = vld [vmem:[#allocation4 + $0x40] sm:$0xff]
    %v53 = vld [vmem:[#allocation4 + $0x48] sm:$0xff]
    %v54 = vld [vmem:[#allocation4 + $0x50] sm:$0xff]
    %v55 = vld [vmem:[#allocation4 + $0x58] sm:$0xff]
    %v56 = vld [vmem:[#allocation4 + $0x60] sm:$0xff]
    %v57 = vld [vmem:[#allocation4 + $0x68] sm:$0xff]
    %v58 = vld [vmem:[#allocation4 + $0x70] sm:$0xff]
    %v59 = vld [vmem:[#allocation4 + $0x78] sm:$0xff]
    %v60 = vld [vmem:[%s3] sm:$0x1]
    %v62 = vlaneseq
    %v63 = vshrl.u32 %v62, 7
    %v64 = vsub.s32 0, %v63
    %v65 = vrot.slane %v60, %v64
    %67 = vmatprep.subr.mxu0 0.0
    %68 = vmatpush1.xpose.msra.mxu0 %v59
    %69 = vmatprep.subr.mxu0 0.0
    %70 = vmatpush1.xpose.msra.mxu0 %v58
    %71 = vmatprep.subr.mxu0 0.0
    %72 = vmatpush1.xpose.msra.mxu0 %v57
    %73 = vmatprep.subr.mxu0 0.0
    %74 = vmatpush1.xpose.msra.mxu0 %v56
    %75 = vmatprep.subr.mxu0 0.0
    %76 = vmatpush1.xpose.msra.mxu0 %v55
    %77 = vmatprep.subr.mxu0 0.0
    %78 = vmatpush1.xpose.msra.mxu0 %v54
    %79 = vmatprep.subr.mxu0 0.0
    %80 = vmatpush1.xpose.msra.mxu0 %v53
    %81 = vmatprep.subr.mxu0 0.0
    %82 = vmatpush1.xpose.msra.mxu0 %v52
    %83 = vmatprep.subr.mxu0 0.0
    %84 = vmatpush1.xpose.msra.mxu0 %v51
    %85 = vmatprep.subr.mxu0 0.0
    %86 = vmatpush1.xpose.msra.mxu0 %v50
    %87 = vmatprep.subr.mxu0 0.0
    %88 = vmatpush1.xpose.msra.mxu0 %v49
    %89 = vmatprep.subr.mxu0 0.0
    %90 = vmatpush1.xpose.msra.mxu0 %v48
    %91 = vmatprep.subr.mxu0 0.0
    %92 = vmatpush1.xpose.msra.mxu0 %v47
    %93 = vmatprep.subr.mxu0 0.0
    %94 = vmatpush1.xpose.msra.mxu0 %v46
    %95 = vmatprep.subr.mxu0 0.0
    %96 = vmatpush1.xpose.msra.mxu0 %v45
    %97 = vmatprep.subr.mxu0 0.0
    %98 = vmatpush1.xpose.msra.mxu0 %v44
    %99 = vmatprep.subr.mxu0 0.0
    %100 = vmatpush2.xpose.msra.mxu0 0.0
    %101 = vmatprep.subr.mxu0 0.0
    %102 = vmatpush2.xpose.msra.mxu0 0.0
    %103 = vmatprep.subr.mxu0 0.0
    %104 = vmatpush2.xpose.msra.mxu0 0.0
    %105 = vmatprep.subr.mxu0 0.0
    %106 = vmatpush2.xpose.msra.mxu0 0.0
    %107 = vmatprep.subr.mxu0 0.0
    %108 = vmatpush2.xpose.msra.mxu0 0.0
    %109 = vmatprep.subr.mxu0 0.0
    %110 = vmatpush2.xpose.msra.mxu0 0.0
    %111 = vmatprep.subr.mxu0 0.0
    %112 = vmatpush2.xpose.msra.mxu0 0.0
    %113 = vmatprep.subr.mxu0 0.0
    %114 = vmatpush2.xpose.msra.mxu0 0.0
    %115 = vmatprep.subr.mxu0 0.0
    %116 = vmatpush2.xpose.msra.mxu0 0.0
    %117 = vmatprep.subr.mxu0 0.0
    %118 = vmatpush2.xpose.msra.mxu0 0.0
    %119 = vmatprep.subr.mxu0 0.0
    %120 = vmatpush2.xpose.msra.mxu0 0.0
    %121 = vmatprep.subr.mxu0 0.0
    %122 = vmatpush2.xpose.msra.mxu0 0.0
    %123 = vmatprep.subr.mxu0 0.0
    %124 = vmatpush2.xpose.msra.mxu0 0.0
    %125 = vmatprep.subr.mxu0 0.0
    %126 = vmatpush2.xpose.msra.mxu0 0.0
    %127 = vmatprep.subr.mxu0 0.0
    %128 = vmatpush2.xpose.msra.mxu0 0.0
    %129 = vmatprep.subr.mxu0 0.0
    %130 = vmatpush2.xpose.msra.mxu0 0.0
    %131 = vmatprep.mubr.f32.mxu0 0.0
    %132 = vmatmul.mubr.f32.gmra.mxu0 %v42
    %v133 = vpop.f32.mrf.mxu0
    %v134 = vadd.f32 %v65, %v133
    %v135 = vpop.f32.mrf.mxu0
    %136 = vmatprep.mubr.f32.mxu0 0.0
    %137 = vmatmul.mubr.f32.gmra.mxu0 %v43
    %v138 = vpop.f32.mrf.mxu0
    %v139 = vadd.f32 %v65, %v138
    %v140 = vpop.f32.mrf.mxu0
    %141 = vdwg.mxu0
    %v142 = vld [vmem:[#allocation2] sm:$0xff]
    %v143 = vld [vmem:[#allocation2 + $0x8] sm:$0xff]
    %144 = vmax.xlane.f32.xlu0 %v134
    %v145 = vpop.xlane.xlu0 %144
    %146 = vmax.xlane.f32.xlu0 %v139
    %v147 = vpop.xlane.xlu0 %146
    %v148 = vmax.f32 %v142, %v145
    %v149 = vmax.f32 %v143, %v147
    %v150 = vld [vmem:[#allocation3] sm:$0xff]
    %v151 = vld [vmem:[#allocation3 + $0x8] sm:$0xff]
    %v152 = vsub.f32 %v142, %v148
    %v153 = vsub.f32 %v143, %v149
    %v154 = vmul.f32 %v152, 1.442695
    %v155 = vpow.pop %v154
    %v156 = vmul.f32 %v153, 1.442695
    %v157 = vpow.pop %v156
    %v158 = vmul.f32 %v150, %v155
    %v159 = vmul.f32 %v151, %v157
    %161 = vset.pattern.permute.xlu0 0
    %162 = vperm.xlu0 %161, %v148
    %v163 = vpop.permute.xlu0 %162
    %166 = vset.pattern.permute.xlu0 0
    %167 = vperm.xlu0 %166, %v149
    %v168 = vpop.permute.xlu0 %167
    %v170 = vsub.f32 %v134, %v163
    %v171 = vsub.f32 %v139, %v168
    %v172 = vmul.f32 %v170, 1.442695
    %v173 = vpow.pop %v172
    %v174 = vmul.f32 %v171, 1.442695
    %v175 = vpow.pop %v174
    %176 = vadd.xlane.f32.xlu0 %v173
    %v177 = vpop.xlane.xlu0 %176
    %178 = vadd.xlane.f32.xlu0 %v175
    %v179 = vpop.xlane.xlu0 %178
    %v180 = vadd.f32 %v158, %v177
    %v181 = vadd.f32 %v159, %v179
    %vm182 = vcmask 7168
    %183 = vst.msk [vmem:[#allocation3] sm:$0xff] %vm182, %v180
    %184 = vst.msk [vmem:[#allocation3 + $0x8] sm:$0xff] %vm182, %v181
    %185 = vst.msk [vmem:[#allocation2] sm:$0xff] %vm182, %v148
    %186 = vst.msk [vmem:[#allocation2 + $0x8] sm:$0xff] %vm182, %v149
    // Predicated region
    $region26: #{tpu_custom_call.1} parent=1 // pred_check
      %p187 = pneg %p31
    $region27: #{tpu_custom_call.1} parent=1 // pred_check_branch
      %189 = sbr.rel (%p187) target = $region29
    $region28: #{tpu_custom_call.1} parent=1 // pred_region
      %v190 = vld [vmem:[#allocation2] sm:$0xff]
      %v191 = vld [vmem:[#allocation2 + $0x8] sm:$0xff]
      %v192 = vld [vmem:[#allocation3] sm:$0xff]
      %v193 = vld [vmem:[#allocation3 + $0x8] sm:$0xff]
      %v194 = vlog2.pop %v192
      %v195 = vmul.f32 %v194, 0.6931472
      %v196 = vlog2.pop %v193
      %v197 = vmul.f32 %v196, 0.6931472
      %v198 = vadd.f32 %v190, %v195
      %v199 = vadd.f32 %v191, %v197
      %v200 = vld [vmem:[%s1] sm:$0xff]
      %v201 = vld [vmem:[%s1 + $0x8] sm:$0xff]
      %v202 = vsub.f32 %v198, %v200
      %v203 = vsub.f32 %v199, %v201
      %204 = vst.msk [vmem:[%s4] sm:$0xff] %vm182, %v202
      %205 = vst.msk [vmem:[%s4 + $0x8] sm:$0xff] %vm182, %v203
    $region29: #{tpu_custom_call.1} parent=1 // pred_fallthru
      _
    // Predicated region
    $region30: #{tpu_custom_call.1} parent=1 // pred_check
      _
    $region31: #{tpu_custom_call.1} parent=1 // pred_check_branch
      %207 = sbr.rel (0) target = $region33
    $region32: #{tpu_custom_call.1} parent=1 // pred_region
      _
    $region33: #{tpu_custom_call.1} parent=1 // pred_fallthru
      _
    // Predicated region
    $region34: #{tpu_custom_call.1} parent=1 // pred_check
      _
    $region35: #{tpu_custom_call.1} parent=1 // pred_check_branch
      %209 = sbr.rel (0) target = $region37
    $region36: #{tpu_custom_call.1} parent=1 // pred_region
      _
    $region37: #{tpu_custom_call.1} parent=1 // pred_fallthru
      _
    %210 = vsyncpa [#allocation5], 1

</llo_original>
